<compile_context>
chip_gen: v7x
topology: tpu7x:2x2x1
jax: 0.10.0
libtpu: 0.0.40
codegen_flags: <defaults>
</compile_context>

<pallas_src>
import jax
import jax.numpy as jnp
from jax import lax
from jax.experimental import pallas as pl
from jax.experimental.pallas import tpu as pltpu


def _dcorr_block_kernel(a_blk_ref, b_blk_ref, a_full_ref, b_full_ref,
                        na_col_ref, nb_col_ref, na_row_ref, nb_row_ref,
                        part_ref):
    """One TM-row strip of both distance matrices -> per-row partial moments."""
    tm = a_blk_ref.shape[0]

    # Gram strips on the MXU: (TM, d) x (N, d), contracting the feature axis
    # of both operands (no explicit transpose), f32 accumulation.
    gram_a = lax.dot_general(
        a_blk_ref[...], a_full_ref[...],
        dimension_numbers=(((1,), (1,)), ((), ())),
        preferred_element_type=jnp.float32)                       # (TM, N)
    gram_b = lax.dot_general(
        b_blk_ref[...], b_full_ref[...],
        dimension_numbers=(((1,), (1,)), ((), ())),
        preferred_element_type=jnp.float32)                       # (TM, N)

    # ||xi - xj||^2 = ||xi||^2 + ||xj||^2 - 2<xi, xj>, then the reference's
    # clamp(.,0,inf); clamp(.,1e-10,1e10); sqrt chain (== clip(.,1e-10,1e10)).
    d_a = jnp.sqrt(jnp.clip(na_col_ref[...] + na_row_ref[...] - 2.0 * gram_a,
                            1e-10, 1e10))
    d_b = jnp.sqrt(jnp.clip(nb_col_ref[...] + nb_row_ref[...] - 2.0 * gram_b,
                            1e-10, 1e10))

    # Single fused pass over the two strips: row sums (== column sums by
    # symmetry of d) and the cross second moment.  sum(dA^2)/sum(dB^2) are
    # derived analytically in the wrapper, so no dA*dA / dB*dB passes here.
    rs_a = jnp.sum(d_a, axis=1, keepdims=True)                    # (TM, 1)
    rs_b = jnp.sum(d_b, axis=1, keepdims=True)                    # (TM, 1)
    p_ab = jnp.sum(d_a * d_b, axis=1, keepdims=True)              # (TM, 1)

    # Pack the three per-row partials into lanes 0..2 of a lane-dense tile.
    lane = lax.broadcasted_iota(jnp.int32, (tm, 128), 1)
    tile = jnp.where(lane == 0, rs_a, 0.0)
    tile = jnp.where(lane == 1, rs_b, tile)
    tile = jnp.where(lane == 2, p_ab, tile)
    part_ref[...] = tile


def distance_correlation(A, B, *, block_m=None, use_bf16_gram=False):
    """Pallas-TPU distance correlation.  A: (N, dA), B: (N, dB) -> f32 scalar.

    use_bf16_gram=True runs the Gram matmuls with bf16 operands / f32
    accumulation (useful on v5e, v6e and v7x for large feature dims); norms
    and the sqrt/centering path stay f32.
    """
    assert A.shape[0] == B.shape[0], "A and B must have the same number of samples"
    n, da = A.shape
    _, db = B.shape

    # --- wrapper-side preprocessing (tiny, XLA) -----------------------------
    # Pre-center features: distances are translation invariant, and centering
    # both removes Gram cancellation and makes the analytic second moment
    # exact (sum_i x_i = 0).
    a32 = A.astype(jnp.float32)
    b32 = B.astype(jnp.float32)
    a32 = a32 - jnp.mean(a32, axis=0, keepdims=True)
    b32 = b32 - jnp.mean(b32, axis=0, keepdims=True)

    na = jnp.sum(a32 * a32, axis=1)                                # (N,) f32
    nb = jnp.sum(b32 * b32, axis=1)                                # (N,) f32

    ak = a32.astype(jnp.bfloat16) if use_bf16_gram else a32
    bk = b32.astype(jnp.bfloat16) if use_bf16_gram else b32

    # --- row-block size ------------------------------------------------------
    if block_m is None:
        if n <= 512:
            block_m = n
        else:
            block_m = next((t for t in (512, 256, 128, 64, 32, 16, 8)
                            if n % t == 0), n)
    assert n % block_m == 0, "block_m must divide num_samples"
    tm = block_m
    num_blocks = n // tm

    # --- VMEM budget / cost hint ---------------------------------------------
    in_b = 2 if use_bf16_gram else 4
    needed = (4 * n * (da + db) * in_b        # full A/B resident (incl. slack)
              + 4 * tm * (da + db) * in_b     # double-buffered row blocks
              + 8 * tm * n * 4                # gram / distance / product temps
              + 8 * n * 4 * 128)              # lane-padded norm vecs + outputs
    try:
        vmem_cap = int(pltpu.get_tpu_info().vmem_capacity_bytes)
    except Exception:
        vmem_cap = 64 << 20                   # conservative: v7x per-TC VMEM
    vmem_limit = int(min(max(needed + (8 << 20), 32 << 20),
                         vmem_cap - (4 << 20)))

    cost = pl.CostEstimate(
        flops=int(2.0 * n * n * (da + db) + 12.0 * n * n),
        transcendentals=int(2 * n * n),        # one sqrt per distance element
        bytes_accessed=int(2 * n * (da + db) * in_b + n * 128 * 4),
    )

    # --- the kernel call -------------------------------------------------------
    partials = pl.pallas_call(
        _dcorr_block_kernel,
        out_shape=jax.ShapeDtypeStruct((n, 128), jnp.float32),
        grid_spec=pltpu.PrefetchScalarGridSpec(
            num_scalar_prefetch=0,
            grid=(num_blocks,),
            in_specs=[
                pl.BlockSpec((tm, da), lambda i: (i, 0)),   # A row block
                pl.BlockSpec((tm, db), lambda i: (i, 0)),   # B row block
                pl.BlockSpec((n, da), lambda i: (0, 0)),    # full A (resident)
                pl.BlockSpec((n, db), lambda i: (0, 0)),    # full B (resident)
                pl.BlockSpec((tm, 1), lambda i: (i, 0)),    # ||a||^2, block rows
                pl.BlockSpec((tm, 1), lambda i: (i, 0)),    # ||b||^2, block rows
                pl.BlockSpec((1, n), lambda i: (0, 0)),     # ||a||^2, all cols
                pl.BlockSpec((1, n), lambda i: (0, 0)),     # ||b||^2, all cols
            ],
            out_specs=pl.BlockSpec((tm, 128), lambda i: (i, 0)),
        ),
        compiler_params=pltpu.CompilerParams(
            dimension_semantics=("parallel",),
            vmem_limit_bytes=vmem_limit,
        ),
        cost_estimate=cost,
    )(ak, bk, ak, bk,
      na.reshape(n, 1), nb.reshape(n, 1),
      na.reshape(1, n), nb.reshape(1, n))

    # --- O(N) combine in the wrapper -------------------------------------------
    rs_a = partials[:, 0]
    rs_b = partials[:, 1]
    p_ab = partials[:, 2]

    nf = jnp.float32(n)
    n2 = nf * nf

    sum_a = jnp.sum(rs_a)
    sum_b = jnp.sum(rs_b)
    s_ab = jnp.sum(p_ab)
    dot_ab = jnp.dot(rs_a, rs_b)
    dot_aa = jnp.dot(rs_a, rs_a)
    dot_bb = jnp.dot(rs_b, rs_b)

    # Analytic raw second moments (data pre-centered => sum_i x_i = 0):
    #   sum_ij ||xi - xj||^2 = 2 N sum_i ||xi||^2 ; the reference's clamp puts
    #   1e-10 (not 0) on the diagonal of d^2, hence the + N*1e-10 term.
    s_aa = 2.0 * nf * jnp.sum(na) + nf * 1e-10
    s_bb = 2.0 * nf * jnp.sum(nb) + nf * 1e-10

    # Doubly-centered second moments without materializing centered matrices:
    #   sum(a_c * b_c) = sum(dA*dB) - 2N<muA,muB> + N^2 gA gB
    c_ab = s_ab - 2.0 * dot_ab / nf + sum_a * sum_b / n2
    c_aa = s_aa - 2.0 * dot_aa / nf + sum_a * sum_a / n2
    c_bb = s_bb - 2.0 * dot_bb / nf + sum_b * sum_b / n2

    cov2_ab = jnp.clip(c_ab / n2, 1e-10, 1e10)
    cov2_aa = jnp.clip(c_aa / n2, 1e-10, 1e10)
    cov2_bb = jnp.clip(c_bb / n2, 1e-10, 1e10)
    var_prod = jnp.clip(jnp.sqrt(cov2_aa) * jnp.sqrt(cov2_bb), 1e-10, 1e10)
    return jnp.sqrt(cov2_ab) / jnp.sqrt(var_prod)


def _distance_correlation_ref(A, B):
    """Pure-JAX reference (direct translation of the PyTorch module)."""
    def dmat(x):
        x = x.astype(jnp.float32)
        xn = jnp.sum(x * x, axis=1, keepdims=True)
        d = xn + xn.T - 2.0 * (x @ x.T)
        d = jnp.sqrt(jnp.clip(jnp.maximum(d, 0.0), 1e-10, 1e10))
        return d - jnp.mean(d, 0, keepdims=True) - jnp.mean(d, 1, keepdims=True) + jnp.mean(d)

    n2 = jnp.float32(A.shape[0] * A.shape[0])
    a, b = dmat(A), dmat(B)
    ab = jnp.clip(jnp.sum(a * b) / n2, 1e-10, 1e10)
    aa = jnp.clip(jnp.sum(a * a) / n2, 1e-10, 1e10)
    bb = jnp.clip(jnp.sum(b * b) / n2, 1e-10, 1e10)
    vp = jnp.clip(jnp.sqrt(aa) * jnp.sqrt(bb), 1e-10, 1e10)
    return jnp.sqrt(ab) / jnp.sqrt(vp)


if __name__ == "__main__":
    key = jax.random.PRNGKey(0)
    kA, kB = jax.random.split(key)
    num_samples, sizeA, sizeB = 16, 128, 256  # A and B may have different widths
    A = jax.random.normal(kA, (num_samples, sizeA), dtype=jnp.float32)
    B = jax.random.normal(kB, (num_samples, sizeB), dtype=jnp.float32)

    ref = jax.block_until_ready(_distance_correlation_ref(A, B))

    # Default (single-block) path.
    out = jax.block_until_ready(distance_correlation(A, B))
    assert jnp.allclose(out, ref, rtol=1e-4, atol=1e-5), (out, ref)

    # Exercise the tiled multi-row-block ("parallel" grid) path as well.
    out_tiled = jax.block_until_ready(distance_correlation(A, B, block_m=8))
    assert jnp.allclose(out_tiled, ref, rtol=1e-4, atol=1e-5), (out_tiled, ref)

    print("KERNEL_OK")
</pallas_src>

<mosaic_0001>
module attributes {stable_mosaic.version = 11 : i64} {
  func.func @_dcorr_block_kernel(%arg0: i32, %arg1: memref<16x128xf32, #tpu.memory_space<vmem>>, %arg2: memref<16x256xf32, #tpu.memory_space<vmem>>, %arg3: memref<16x128xf32, #tpu.memory_space<vmem>>, %arg4: memref<16x256xf32, #tpu.memory_space<vmem>>, %arg5: memref<16x1xf32, #tpu.memory_space<vmem>>, %arg6: memref<16x1xf32, #tpu.memory_space<vmem>>, %arg7: memref<1x16xf32, #tpu.memory_space<vmem>>, %arg8: memref<1x16xf32, #tpu.memory_space<vmem>>, %arg9: memref<16x128xf32, #tpu.memory_space<vmem>>) attributes {dimension_semantics = [#tpu.dimension_semantics<parallel>], iteration_bounds = array<i64: 1>, scalar_prefetch = 0 : i64, scratch_operands = 0 : i64, tpu.core_type = #tpu.core_type<tc>, window_params = [{transform_indices = @transform_0, window_bounds = array<i64: 16, 128>}, {transform_indices = @transform_1, window_bounds = array<i64: 16, 256>}, {pipeline_mode = #tpu.pipeline_mode<synchronous>, transform_indices = @transform_2, window_bounds = array<i64: 16, 128>}, {pipeline_mode = #tpu.pipeline_mode<synchronous>, transform_indices = @transform_3, window_bounds = array<i64: 16, 256>}, {transform_indices = @transform_4, window_bounds = array<i64: 16, 1>}, {transform_indices = @transform_5, window_bounds = array<i64: 16, 1>}, {pipeline_mode = #tpu.pipeline_mode<synchronous>, transform_indices = @transform_6, window_bounds = array<i64: 1, 16>}, {pipeline_mode = #tpu.pipeline_mode<synchronous>, transform_indices = @transform_7, window_bounds = array<i64: 1, 16>}, {transform_indices = @transform_8, window_bounds = array<i64: 16, 128>}]} {
    %c0 = arith.constant 0 : index
    %c0_0 = arith.constant 0 : index
    %0 = vector.load %arg1[%c0, %c0_0] : memref<16x128xf32, #tpu.memory_space<vmem>>, vector<16x128xf32>
    %c0_1 = arith.constant 0 : index
    %c0_2 = arith.constant 0 : index
    %1 = vector.load %arg3[%c0_1, %c0_2] : memref<16x128xf32, #tpu.memory_space<vmem>>, vector<16x128xf32>
    %cst = arith.constant dense<0.000000e+00> : vector<16x16xf32>
    %2 = tpu.matmul %0, %1, %cst {dimension_numbers = #tpu.dot_dimension_numbers<[1], [1], [0], [0], [0, 0, 1, 0], [], []>} : vector<16x128xf32>, vector<16x128xf32>, vector<16x16xf32> -> vector<16x16xf32>
    %c0_3 = arith.constant 0 : index
    %c0_4 = arith.constant 0 : index
    %3 = vector.load %arg2[%c0_3, %c0_4] : memref<16x256xf32, #tpu.memory_space<vmem>>, vector<16x256xf32>
    %c0_5 = arith.constant 0 : index
    %c0_6 = arith.constant 0 : index
    %4 = vector.load %arg4[%c0_5, %c0_6] : memref<16x256xf32, #tpu.memory_space<vmem>>, vector<16x256xf32>
    %cst_7 = arith.constant dense<0.000000e+00> : vector<16x16xf32>
    %5 = tpu.matmul %3, %4, %cst_7 {dimension_numbers = #tpu.dot_dimension_numbers<[1], [1], [0], [0], [0, 0, 1, 0], [], []>} : vector<16x256xf32>, vector<16x256xf32>, vector<16x16xf32> -> vector<16x16xf32>
    %c0_8 = arith.constant 0 : index
    %c0_9 = arith.constant 0 : index
    %6 = vector.load %arg5[%c0_8, %c0_9] : memref<16x1xf32, #tpu.memory_space<vmem>>, vector<16x1xf32>
    %c0_10 = arith.constant 0 : index
    %c0_11 = arith.constant 0 : index
    %7 = vector.load %arg7[%c0_10, %c0_11] : memref<1x16xf32, #tpu.memory_space<vmem>>, vector<1x16xf32>
    %8 = vector.broadcast %6 : vector<16x1xf32> to vector<16x16xf32>
    %9 = vector.broadcast %7 : vector<1x16xf32> to vector<16x16xf32>
    %10 = arith.addf %8, %9 : vector<16x16xf32>
    %cst_12 = arith.constant 2.000000e+00 : f32
    %11 = vector.broadcast %cst_12 : f32 to vector<16x16xf32>
    %12 = arith.mulf %11, %2 : vector<16x16xf32>
    %13 = arith.subf %10, %12 : vector<16x16xf32>
    %cst_13 = arith.constant 1.000000e-10 : f32
    %cst_14 = arith.constant 1.000000e+10 : f32
    %14 = vector.broadcast %cst_13 : f32 to vector<16x16xf32>
    %15 = arith.maximumf %14, %13 : vector<16x16xf32>
    %16 = vector.broadcast %cst_14 : f32 to vector<16x16xf32>
    %17 = arith.minimumf %16, %15 : vector<16x16xf32>
    %18 = math.sqrt %17 : vector<16x16xf32>
    %c0_15 = arith.constant 0 : index
    %c0_16 = arith.constant 0 : index
    %19 = vector.load %arg6[%c0_15, %c0_16] : memref<16x1xf32, #tpu.memory_space<vmem>>, vector<16x1xf32>
    %c0_17 = arith.constant 0 : index
    %c0_18 = arith.constant 0 : index
    %20 = vector.load %arg8[%c0_17, %c0_18] : memref<1x16xf32, #tpu.memory_space<vmem>>, vector<1x16xf32>
    %21 = vector.broadcast %19 : vector<16x1xf32> to vector<16x16xf32>
    %22 = vector.broadcast %20 : vector<1x16xf32> to vector<16x16xf32>
    %23 = arith.addf %21, %22 : vector<16x16xf32>
    %cst_19 = arith.constant 2.000000e+00 : f32
    %24 = vector.broadcast %cst_19 : f32 to vector<16x16xf32>
    %25 = arith.mulf %24, %5 : vector<16x16xf32>
    %26 = arith.subf %23, %25 : vector<16x16xf32>
    %cst_20 = arith.constant 1.000000e-10 : f32
    %cst_21 = arith.constant 1.000000e+10 : f32
    %27 = vector.broadcast %cst_20 : f32 to vector<16x16xf32>
    %28 = arith.maximumf %27, %26 : vector<16x16xf32>
    %29 = vector.broadcast %cst_21 : f32 to vector<16x16xf32>
    %30 = arith.minimumf %29, %28 : vector<16x16xf32>
    %31 = math.sqrt %30 : vector<16x16xf32>
    %cst_22 = arith.constant dense<0.000000e+00> : vector<16xf32>
    %32 = vector.multi_reduction <add>, %18, %cst_22 [1] : vector<16x16xf32> to vector<16xf32>
    %33 = vector.shape_cast %32 : vector<16xf32> to vector<16x1xf32>
    %cst_23 = arith.constant dense<0.000000e+00> : vector<16xf32>
    %34 = vector.multi_reduction <add>, %31, %cst_23 [1] : vector<16x16xf32> to vector<16xf32>
    %35 = vector.shape_cast %34 : vector<16xf32> to vector<16x1xf32>
    %36 = arith.mulf %18, %31 : vector<16x16xf32>
    %cst_24 = arith.constant dense<0.000000e+00> : vector<16xf32>
    %37 = vector.multi_reduction <add>, %36, %cst_24 [1] : vector<16x16xf32> to vector<16xf32>
    %38 = vector.shape_cast %37 : vector<16xf32> to vector<16x1xf32>
    %39 = tpu.iota {dimensions = array<i32: 1>} : vector<16x128xi32>
    %c0_i32 = arith.constant 0 : i32
    %40 = vector.broadcast %c0_i32 : i32 to vector<16x128xi32>
    %41 = arith.cmpi eq, %39, %40 : vector<16x128xi32>
    %cst_25 = arith.constant 0.000000e+00 : f32
    %42 = vector.shape_cast %33 : vector<16x1xf32> to vector<16x1xf32>
    %43 = vector.broadcast %42 : vector<16x1xf32> to vector<16x128xf32>
    %44 = vector.broadcast %cst_25 : f32 to vector<16x128xf32>
    %45 = arith.select %41, %43, %44 : vector<16x128xi1>, vector<16x128xf32>
    %c1_i32 = arith.constant 1 : i32
    %46 = vector.broadcast %c1_i32 : i32 to vector<16x128xi32>
    %47 = arith.cmpi eq, %39, %46 : vector<16x128xi32>
    %48 = vector.shape_cast %35 : vector<16x1xf32> to vector<16x1xf32>
    %49 = vector.broadcast %48 : vector<16x1xf32> to vector<16x128xf32>
    %50 = arith.select %47, %49, %45 : vector<16x128xi1>, vector<16x128xf32>
    %c2_i32 = arith.constant 2 : i32
    %51 = vector.broadcast %c2_i32 : i32 to vector<16x128xi32>
    %52 = arith.cmpi eq, %39, %51 : vector<16x128xi32>
    %53 = vector.shape_cast %38 : vector<16x1xf32> to vector<16x1xf32>
    %54 = vector.broadcast %53 : vector<16x1xf32> to vector<16x128xf32>
    %55 = arith.select %52, %54, %50 : vector<16x128xi1>, vector<16x128xf32>
    %c0_26 = arith.constant 0 : index
    %c0_27 = arith.constant 0 : index
    %56 = vector.load %arg9[%c0_26, %c0_27] : memref<16x128xf32, #tpu.memory_space<vmem>>, vector<16x128xf32>
    tpu.vector_store %arg9[%c0_26, %c0_27], %55 {strides = array<i32>} : memref<16x128xf32, #tpu.memory_space<vmem>>, vector<16x128xf32>,
    return
  }
  func.func @transform_0(%arg0: i32) -> (i32, i32) {
    %c0_i32 = arith.constant 0 : i32
    %c0_i32_0 = arith.constant 0 : i32
    return %arg0, %c0_i32 : i32, i32
  }
  func.func @transform_1(%arg0: i32) -> (i32, i32) {
    %c0_i32 = arith.constant 0 : i32
    %c0_i32_0 = arith.constant 0 : i32
    return %arg0, %c0_i32 : i32, i32
  }
  func.func @transform_2(%arg0: i32) -> (i32, i32) {
    %c0_i32 = arith.constant 0 : i32
    %c0_i32_0 = arith.constant 0 : i32
    %c0_i32_1 = arith.constant 0 : i32
    return %c0_i32, %c0_i32_0 : i32, i32
  }
  func.func @transform_3(%arg0: i32) -> (i32, i32) {
    %c0_i32 = arith.constant 0 : i32
    %c0_i32_0 = arith.constant 0 : i32
    %c0_i32_1 = arith.constant 0 : i32
    return %c0_i32, %c0_i32_0 : i32, i32
  }
  func.func @transform_4(%arg0: i32) -> (i32, i32) {
    %c0_i32 = arith.constant 0 : i32
    %c0_i32_0 = arith.constant 0 : i32
    return %arg0, %c0_i32 : i32, i32
  }
  func.func @transform_5(%arg0: i32) -> (i32, i32) {
    %c0_i32 = arith.constant 0 : i32
    %c0_i32_0 = arith.constant 0 : i32
    return %arg0, %c0_i32 : i32, i32
  }
  func.func @transform_6(%arg0: i32) -> (i32, i32) {
    %c0_i32 = arith.constant 0 : i32
    %c0_i32_0 = arith.constant 0 : i32
    %c0_i32_1 = arith.constant 0 : i32
    return %c0_i32, %c0_i32_0 : i32, i32
  }
  func.func @transform_7(%arg0: i32) -> (i32, i32) {
    %c0_i32 = arith.constant 0 : i32
    %c0_i32_0 = arith.constant 0 : i32
    %c0_i32_1 = arith.constant 0 : i32
    return %c0_i32, %c0_i32_0 : i32, i32
  }
  func.func @transform_8(%arg0: i32) -> (i32, i32) {
    %c0_i32 = arith.constant 0 : i32
    %c0_i32_0 = arith.constant 0 : i32
    return %arg0, %c0_i32 : i32, i32
  }
}

</mosaic_0001>

<llo_original>
// kernel: tpu_custom_call.1
$region0: #{tpu_custom_call.1}
  #allocation0 [shape = 'u32[]', space=smem, size = 0x4, offset = 0x4, fixed_abs, tag = 'smem constant byte address 0x4 - core index']
  #allocation1 [shape = 'u32[144,128]{1,0:T(1,128)}', space=vmem, size = 0x12000, scoped, tag = 'internal scratch']
  %s0 = inlined_call_operand.hbm [shape: f32[16,128], index: 0, kind: input, shape index: {}]
  %s1 = inlined_call_operand.vmem [shape: f32[16,256], index: 1, kind: input, shape index: {}]
  %s2 = inlined_call_operand.hbm [shape: f32[16,128], index: 2, kind: input, shape index: {}]
  %s3 = inlined_call_operand.hbm [shape: f32[16,256], index: 3, kind: input, shape index: {}]
  %s4 = inlined_call_operand.vmem [shape: f32[16,1], index: 4, kind: input, shape index: {}]
  %s5 = inlined_call_operand.vmem [shape: f32[16,1], index: 5, kind: input, shape index: {}]
  %s6 = inlined_call_operand.vmem [shape: f32[1,16], index: 6, kind: input, shape index: {}]
  %s7 = inlined_call_operand.vmem [shape: f32[1,16], index: 7, kind: input, shape index: {}]
  %s8 = inlined_call_operand.hbm [shape: f32[16,128], index: 8, kind: output, shape index: {}]
  %s9 = sld [smem:[#allocation0]]
  $region54: #{tpu_custom_call.1} parent=0
    _
  %s11 = ssub.s32 1, %s9
  %s12 = scalar_select 0, %s11, %s9
  $region1: #{tpu_custom_call.1} parent=0
    #allocation2 [shape = 'u8[8192]{0}', space=vmem, size = 0x2000, scoped, tag = 'input window, operand 0, single buffered']
    #allocation3 [shape = 's32[1]{0}', space=sflag, size = 0x4, scoped, tag = 'scoped memory for tpu_custom_call.1']
    #allocation4 [shape = 's32[1]{0}', space=sflag, size = 0x4, scoped, tag = 'scoped memory for tpu_custom_call.1']
    #allocation5 [shape = 'u8[8192]{0}', space=vmem, size = 0x2000, scoped, tag = 'input window, operand 2, single buffered']
    #allocation6 [shape = 's32[1]{0}', space=sflag, size = 0x4, scoped, tag = 'scoped memory for tpu_custom_call.1']
    #allocation7 [shape = 'u8[16384]{0}', space=vmem, size = 0x4000, scoped, tag = 'input window, operand 3, single buffered']
    #allocation8 [shape = 'u8[8192]{0}', space=vmem, size = 0x2000, scoped, tag = 'output window, operand 0, single buffered']
    %13 = vsyncpa [#allocation3], 0
    %14 = vsyncpa [#allocation6], 0
    %15 = vsyncpa [#allocation4], 0
    // Predicated region
    $region2: #{tpu_custom_call.1} parent=1 // pred_check
      _
    $region3: #{tpu_custom_call.1} parent=1 // pred_check_branch
      %17 = sbr.rel (0) target = $region5
    $region4: #{tpu_custom_call.1} parent=1 // pred_region
      %s19 = ssub.s32 256, 256
      %20 = vsyncadd [#allocation3], %s19
      %s21 = sshll.u32 [#allocation2], 4
      %s22 = int_to_ptr.vmem [resolvable:$true] %s21
      %27 = dma.hbm_to_vmem [thread:$0]  %s0, 256, %s22, [#allocation3], 128, 128, 8
    $region5: #{tpu_custom_call.1} parent=1 // pred_fallthru
      _
    // Predicated region
    $region6: #{tpu_custom_call.1} parent=1 // pred_check
      _
    $region7: #{tpu_custom_call.1} parent=1 // pred_check_branch
      %29 = sbr.rel (0) target = $region9
    $region8: #{tpu_custom_call.1} parent=1 // pred_region
      _
    $region9: #{tpu_custom_call.1} parent=1 // pred_fallthru
      _
    // Predicated region
    $region10: #{tpu_custom_call.1} parent=1 // pred_check
      _
    $region11: #{tpu_custom_call.1} parent=1 // pred_check_branch
      %31 = sbr.rel (0) target = $region13
    $region12: #{tpu_custom_call.1} parent=1 // pred_region
      %s33 = ssub.s32 256, 256
      %34 = vsyncadd [#allocation6], %s33
      %s35 = sshll.u32 [#allocation5], 4
      %s36 = int_to_ptr.vmem [resolvable:$true] %s35
      %41 = dma.hbm_to_vmem [thread:$0]  %s2, 256, %s36, [#allocation6], 128, 128, 8
    $region13: #{tpu_custom_call.1} parent=1 // pred_fallthru
      _
    // Predicated region
    $region14: #{tpu_custom_call.1} parent=1 // pred_check
      _
    $region15: #{tpu_custom_call.1} parent=1 // pred_check_branch
      %43 = sbr.rel (0) target = $region17
    $region16: #{tpu_custom_call.1} parent=1 // pred_region
      %s45 = ssub.s32 512, 512
      %46 = vsyncadd [#allocation6], %s45
      %s47 = sshll.u32 [#allocation7], 4
      %s48 = int_to_ptr.vmem [resolvable:$true] %s47
      %53 = dma.hbm_to_vmem [thread:$0]  %s3, 512, %s48, [#allocation6], 256, 256, 16
    $region17: #{tpu_custom_call.1} parent=1 // pred_fallthru
      _
    // Predicated region
    $region18: #{tpu_custom_call.1} parent=1 // pred_check
      _
    $region19: #{tpu_custom_call.1} parent=1 // pred_check_branch
      %55 = sbr.rel (0) target = $region21
    $region20: #{tpu_custom_call.1} parent=1 // pred_region
      _
    $region21: #{tpu_custom_call.1} parent=1 // pred_fallthru
      _
    // Predicated region
    $region22: #{tpu_custom_call.1} parent=1 // pred_check
      _
    $region23: #{tpu_custom_call.1} parent=1 // pred_check_branch
      %57 = sbr.rel (0) target = $region25
    $region24: #{tpu_custom_call.1} parent=1 // pred_region
      _
    $region25: #{tpu_custom_call.1} parent=1 // pred_fallthru
      _
    // Predicated region
    $region26: #{tpu_custom_call.1} parent=1 // pred_check
      _
    $region27: #{tpu_custom_call.1} parent=1 // pred_check_branch
      %59 = sbr.rel (0) target = $region29
    $region28: #{tpu_custom_call.1} parent=1 // pred_region
      _
    $region29: #{tpu_custom_call.1} parent=1 // pred_fallthru
      _
    // Predicated region
    $region30: #{tpu_custom_call.1} parent=1 // pred_check
      _
    $region31: #{tpu_custom_call.1} parent=1 // pred_check_branch
      %61 = sbr.rel (0) target = $region33
    $region32: #{tpu_custom_call.1} parent=1 // pred_region
      _
    $region33: #{tpu_custom_call.1} parent=1 // pred_fallthru
      _
    // Predicated region
    $region34: #{tpu_custom_call.1} parent=1 // pred_check
      _
    $region35: #{tpu_custom_call.1} parent=1 // pred_check_branch
      %63 = sbr.rel (0) target = $region37
    $region36: #{tpu_custom_call.1} parent=1 // pred_region
      %64 = dma.done [#allocation3], 256
    $region37: #{tpu_custom_call.1} parent=1 // pred_fallthru
      _
    // Predicated region
    $region38: #{tpu_custom_call.1} parent=1 // pred_check
      _
    $region39: #{tpu_custom_call.1} parent=1 // pred_check_branch
      %66 = sbr.rel (0) target = $region41
    $region40: #{tpu_custom_call.1} parent=1 // pred_region
      %67 = dma.done [#allocation6], 256
    $region41: #{tpu_custom_call.1} parent=1 // pred_fallthru
      _
    // Predicated region
    $region42: #{tpu_custom_call.1} parent=1 // pred_check
      _
    $region43: #{tpu_custom_call.1} parent=1 // pred_check_branch
      %69 = sbr.rel (0) target = $region45
    $region44: #{tpu_custom_call.1} parent=1 // pred_region
      %70 = dma.done [#allocation6], 512
    $region45: #{tpu_custom_call.1} parent=1 // pred_fallthru
      _
    %v71 = vld [vmem:[#allocation2] sm:$0xff]
    %v72 = vld [vmem:[#allocation2 + $0x8] sm:$0xff]
    %v73 = vld [vmem:[#allocation5] sm:$0xff]
    %v74 = vld [vmem:[#allocation5 + $0x8] sm:$0xff]
    %75 = vmatprep.subr.mxu0 0.0
    %76 = vmatpush1.xpose.msra.mxu0 %v73
    %77 = vmatprep.subr.mxu0 0.0
    %78 = vmatpush1.xpose.msra.mxu0 %v74
    %79 = vmatprep.subr.mxu0 0.0
    %80 = vmatpush1.xpose.msra.mxu0 0.0
    %81 = vmatprep.subr.mxu0 0.0
    %82 = vmatpush1.xpose.msra.mxu0 0.0
    %83 = vmatprep.subr.mxu0 0.0
    %84 = vmatpush1.xpose.msra.mxu0 0.0
    %85 = vmatprep.subr.mxu0 0.0
    %86 = vmatpush1.xpose.msra.mxu0 0.0
    %87 = vmatprep.subr.mxu0 0.0
    %88 = vmatpush1.xpose.msra.mxu0 0.0
    %89 = vmatprep.subr.mxu0 0.0
    %90 = vmatpush1.xpose.msra.mxu0 0.0
    %91 = vmatprep.subr.mxu0 0.0
    %92 = vmatpush1.xpose.msra.mxu0 0.0
    %93 = vmatprep.subr.mxu0 0.0
    %94 = vmatpush1.xpose.msra.mxu0 0.0
    %95 = vmatprep.subr.mxu0 0.0
    %96 = vmatpush1.xpose.msra.mxu0 0.0
    %97 = vmatprep.subr.mxu0 0.0
    %98 = vmatpush1.xpose.msra.mxu0 0.0
    %99 = vmatprep.subr.mxu0 0.0
    %100 = vmatpush1.xpose.msra.mxu0 0.0
    %101 = vmatprep.subr.mxu0 0.0
    %102 = vmatpush1.xpose.msra.mxu0 0.0
    %103 = vmatprep.subr.mxu0 0.0
    %104 = vmatpush1.xpose.msra.mxu0 0.0
    %105 = vmatprep.subr.mxu0 0.0
    %106 = vmatpush1.xpose.msra.mxu0 0.0
    %107 = vmatprep.subr.mxu0 0.0
    %108 = vmatpush1.xpose.msra.mxu0 0.0
    %109 = vmatprep.subr.mxu0 0.0
    %110 = vmatpush1.xpose.msra.mxu0 0.0
    %111 = vmatprep.subr.mxu0 0.0
    %112 = vmatpush1.xpose.msra.mxu0 0.0
    %113 = vmatprep.subr.mxu0 0.0
    %114 = vmatpush1.xpose.msra.mxu0 0.0
    %115 = vmatprep.subr.mxu0 0.0
    %116 = vmatpush1.xpose.msra.mxu0 0.0
    %117 = vmatprep.subr.mxu0 0.0
    %118 = vmatpush1.xpose.msra.mxu0 0.0
    %119 = vmatprep.subr.mxu0 0.0
    %120 = vmatpush1.xpose.msra.mxu0 0.0
    %121 = vmatprep.subr.mxu0 0.0
    %122 = vmatpush1.xpose.msra.mxu0 0.0
    %123 = vmatprep.subr.mxu0 0.0
    %124 = vmatpush1.xpose.msra.mxu0 0.0
    %125 = vmatprep.subr.mxu0 0.0
    %126 = vmatpush1.xpose.msra.mxu0 0.0
    %127 = vmatprep.subr.mxu0 0.0
    %128 = vmatpush1.xpose.msra.mxu0 0.0
    %129 = vmatprep.subr.mxu0 0.0
    %130 = vmatpush1.xpose.msra.mxu0 0.0
    %131 = vmatprep.subr.mxu0 0.0
    %132 = vmatpush1.xpose.msra.mxu0 0.0
    %133 = vmatprep.subr.mxu0 0.0
    %134 = vmatpush1.xpose.msra.mxu0 0.0
    %135 = vmatprep.subr.mxu0 0.0
    %136 = vmatpush1.xpose.msra.mxu0 0.0
    %137 = vmatprep.subr.mxu0 0.0
    %138 = vmatpush1.xpose.msra.mxu0 0.0
    %139 = vmatprep.mubr.f32.mxu0 0.0
    %140 = vmatmul.mubr.f32.gmra.mrb[0].mxu0 %v71
    %v141 = vpop.f32.mrb[0].mxu0
    %v142 = vadd.f32 0.0, %v141
    %v143 = vpop.f32.mrb[0].mxu0
    %144 = vmatprep.mubr.f32.mxu0 0.0
    %145 = vmatmul.mubr.f32.gmra.mrb[0].mxu0 %v72
    %v146 = vpop.f32.mrb[0].mxu0
    %v147 = vadd.f32 0.0, %v146
    %v148 = vpop.f32.mrb[0].mxu0
    %149 = vdwg.mxu0
    %v150 = vld [vmem:[%s1] sm:$0xff]
    %v151 = vld [vmem:[%s1 + $0x8] sm:$0xff]
    %v152 = vld [vmem:[%s1 + $0x10] sm:$0xff]
    %v153 = vld [vmem:[%s1 + $0x18] sm:$0xff]
    %v154 = vld [vmem:[#allocation7] sm:$0xff]
    %v155 = vld [vmem:[#allocation7 + $0x8] sm:$0xff]
    %v156 = vld [vmem:[#allocation7 + $0x10] sm:$0xff]
    %v157 = vld [vmem:[#allocation7 + $0x18] sm:$0xff]
    %158 = vmatprep.subr.mxu0 %v155
    %159 = vmatpush1.xpose.msra.mxu0 %v154
    %160 = vmatprep.subr.mxu0 %v157
    %161 = vmatpush1.xpose.msra.mxu0 %v156
    %162 = vmatprep.subr.mxu0 0.0
    %163 = vmatpush1.xpose.msra.mxu0 0.0
    %164 = vmatprep.subr.mxu0 0.0
    %165 = vmatpush1.xpose.msra.mxu0 0.0
    %166 = vmatprep.subr.mxu0 0.0
    %167 = vmatpush1.xpose.msra.mxu0 0.0
    %168 = vmatprep.subr.mxu0 0.0
    %169 = vmatpush1.xpose.msra.mxu0 0.0
    %170 = vmatprep.subr.mxu0 0.0
    %171 = vmatpush1.xpose.msra.mxu0 0.0
    %172 = vmatprep.subr.mxu0 0.0
    %173 = vmatpush1.xpose.msra.mxu0 0.0
    %174 = vmatprep.subr.mxu0 0.0
    %175 = vmatpush1.xpose.msra.mxu0 0.0
    %176 = vmatprep.subr.mxu0 0.0
    %177 = vmatpush1.xpose.msra.mxu0 0.0
    %178 = vmatprep.subr.mxu0 0.0
    %179 = vmatpush1.xpose.msra.mxu0 0.0
    %180 = vmatprep.subr.mxu0 0.0
    %181 = vmatpush1.xpose.msra.mxu0 0.0
    %182 = vmatprep.subr.mxu0 0.0
    %183 = vmatpush1.xpose.msra.mxu0 0.0
    %184 = vmatprep.subr.mxu0 0.0
    %185 = vmatpush1.xpose.msra.mxu0 0.0
    %186 = vmatprep.subr.mxu0 0.0
    %187 = vmatpush1.xpose.msra.mxu0 0.0
    %188 = vmatprep.subr.mxu0 0.0
    %189 = vmatpush1.xpose.msra.mxu0 0.0
    %190 = vmatprep.subr.mxu0 0.0
    %191 = vmatpush1.xpose.msra.mxu0 0.0
    %192 = vmatprep.subr.mxu0 0.0
    %193 = vmatpush1.xpose.msra.mxu0 0.0
    %194 = vmatprep.subr.mxu0 0.0
    %195 = vmatpush1.xpose.msra.mxu0 0.0
    %196 = vmatprep.subr.mxu0 0.0
    %197 = vmatpush1.xpose.msra.mxu0 0.0
    %198 = vmatprep.subr.mxu0 0.0
    %199 = vmatpush1.xpose.msra.mxu0 0.0
    %200 = vmatprep.subr.mxu0 0.0
    %201 = vmatpush1.xpose.msra.mxu0 0.0
    %202 = vmatprep.subr.mxu0 0.0
    %203 = vmatpush1.xpose.msra.mxu0 0.0
    %204 = vmatprep.subr.mxu0 0.0
    %205 = vmatpush1.xpose.msra.mxu0 0.0
    %206 = vmatprep.subr.mxu0 0.0
    %207 = vmatpush1.xpose.msra.mxu0 0.0
    %208 = vmatprep.subr.mxu0 0.0
    %209 = vmatpush1.xpose.msra.mxu0 0.0
    %210 = vmatprep.subr.mxu0 0.0
    %211 = vmatpush1.xpose.msra.mxu0 0.0
    %212 = vmatprep.subr.mxu0 0.0
    %213 = vmatpush1.xpose.msra.mxu0 0.0
    %214 = vmatprep.subr.mxu0 0.0
    %215 = vmatpush1.xpose.msra.mxu0 0.0
    %216 = vmatprep.subr.mxu0 0.0
    %217 = vmatpush1.xpose.msra.mxu0 0.0
    %218 = vmatprep.subr.mxu0 0.0
    %219 = vmatpush1.xpose.msra.mxu0 0.0
    %220 = vmatprep.subr.mxu0 0.0
    %221 = vmatpush1.xpose.msra.mxu0 0.0
    %222 = vmatprep.mubr.f32.mxu0 %v151
    %223 = vmatmul.mubr.f32.gmra.mrb[0].mxu0 %v150
    %v224 = vpop.f32.mrb[0].mxu0
    %v225 = vadd.f32 0.0, %v224
    %v226 = vpop.f32.mrb[0].mxu0
    %227 = vmatprep.mubr.f32.mxu0 %v153
    %228 = vmatmul.mubr.f32.gmra.mrb[0].mxu0 %v152
    %v229 = vpop.f32.mrb[0].mxu0
    %v230 = vadd.f32 0.0, %v229
    %v231 = vpop.f32.mrb[0].mxu0
    %232 = vdwg.mxu0
    %v233 = vld [vmem:[%s4] sm:$0xff]
    %v234 = vld [vmem:[%s4 + $0x8] sm:$0xff]
    %v235 = vld [vmem:[%s6] sm:$0x1]
    %237 = vset.pattern.permute.xlu0 0
    %238 = vperm.xlu0 %237, %v233
    %v239 = vpop.permute.xlu0 %238
    %242 = vset.pattern.permute.xlu0 0
    %243 = vperm.xlu0 %242, %v234
    %v244 = vpop.permute.xlu0 %243
    %v247 = vlaneseq
    %v248 = vshrl.u32 %v247, 7
    %v249 = vsub.s32 0, %v248
    %v250 = vrot.slane %v235, %v249
    %v252 = vadd.f32 %v239, %v250
    %v253 = vadd.f32 %v244, %v250
    %v254 = vmul.f32 %v142, 2.0
    %v255 = vmul.f32 %v147, 2.0
    %v256 = vsub.f32 %v252, %v254
    %v257 = vsub.f32 %v253, %v255
    %v258 = vmax.f32 %v256, 1e-10
    %v259 = vmax.f32 %v257, 1e-10
    %v260 = vmin.f32 %v258, 1e+10
    %v261 = vmin.f32 %v259, 1e+10
    %v262 = vrsqrt.pop %v260
    %v263 = vmul.f32 %v260, %v262
    %vm264 = vcmp.eq.f32.partialorder %v260, inf
    %v265 = vsel %vm264, %v260, %v263
    %vm266 = vcmp.eq.f32.partialorder %v260, 0.0
    %v267 = vand.u32 %v260, 2147483648
    %v268 = vsel %vm266, %v267, %v265
    %v269 = vrsqrt.pop %v261
    %v270 = vmul.f32 %v261, %v269
    %vm271 = vcmp.eq.f32.partialorder %v261, inf
    %v272 = vsel %vm271, %v261, %v270
    %vm273 = vcmp.eq.f32.partialorder %v261, 0.0
    %v274 = vand.u32 %v261, 2147483648
    %v275 = vsel %vm273, %v274, %v272
    %v276 = vld [vmem:[%s5] sm:$0xff]
    %v277 = vld [vmem:[%s5 + $0x8] sm:$0xff]
    %v278 = vld [vmem:[%s7] sm:$0x1]
    %280 = vset.pattern.permute.xlu0 0
    %281 = vperm.xlu0 %280, %v276
    %v282 = vpop.permute.xlu0 %281
    %285 = vset.pattern.permute.xlu0 0
    %286 = vperm.xlu0 %285, %v277
    %v287 = vpop.permute.xlu0 %286
    %v290 = vlaneseq
    %v291 = vshrl.u32 %v290, 7
    %v292 = vsub.s32 0, %v291
    %v293 = vrot.slane %v278, %v292
    %v295 = vadd.f32 %v282, %v293
    %v296 = vadd.f32 %v287, %v293
    %v297 = vmul.f32 %v225, 2.0
    %v298 = vmul.f32 %v230, 2.0
    %v299 = vsub.f32 %v295, %v297
    %v300 = vsub.f32 %v296, %v298
    %v301 = vmax.f32 %v299, 1e-10
    %v302 = vmax.f32 %v300, 1e-10
    %v303 = vmin.f32 %v301, 1e+10
    %v304 = vmin.f32 %v302, 1e+10
    %v305 = vrsqrt.pop %v303
    %v306 = vmul.f32 %v303, %v305
    %vm307 = vcmp.eq.f32.partialorder %v303, inf
    %v308 = vsel %vm307, %v303, %v306
    %vm309 = vcmp.eq.f32.partialorder %v303, 0.0
    %v310 = vand.u32 %v303, 2147483648
    %v311 = vsel %vm309, %v310, %v308
    %v312 = vrsqrt.pop %v304
    %v313 = vmul.f32 %v304, %v312
    %vm314 = vcmp.eq.f32.partialorder %v304, inf
    %v315 = vsel %vm314, %v304, %v313
    %vm316 = vcmp.eq.f32.partialorder %v304, 0.0
    %v317 = vand.u32 %v304, 2147483648
    %v318 = vsel %vm316, %v317, %v315
    %vm319 = vcmask 130048
    %v320 = vsel %vm319, %v268, 0.0
    %321 = vadd.xlane.f32.xlu0 %v320
    %v322 = vpop.xlane.xlu0 %321
    %v323 = vsel %vm319, %v275, 0.0
    %324 = vadd.xlane.f32.xlu0 %v323
    %v325 = vpop.xlane.xlu0 %324
    %v326 = vsel %vm319, %v311, 0.0
    %327 = vadd.xlane.f32.xlu0 %v326
    %v328 = vpop.xlane.xlu0 %327
    %v329 = vsel %vm319, %v318, 0.0
    %330 = vadd.xlane.f32.xlu0 %v329
    %v331 = vpop.xlane.xlu0 %330
    %v332 = vmul.f32 %v268, %v311
    %v333 = vmul.f32 %v275, %v318
    %v334 = vsel %vm319, %v332, 0.0
    %335 = vadd.xlane.f32.xlu0 %v334
    %v336 = vpop.xlane.xlu0 %335
    %v337 = vsel %vm319, %v333, 0.0
    %338 = vadd.xlane.f32.xlu0 %v337
    %v339 = vpop.xlane.xlu0 %338
    %v340 = vlaneseq
    %v341 = vand.u32 %v340, 127
    %vm342 = vcmp.eq.s32.totalorder %v341, 0
    %v343 = vsel %vm342, %v322, 0.0
    %v344 = vsel %vm342, %v325, 0.0
    %vm345 = vcmp.eq.s32.totalorder %v341, 1
    %v346 = vsel %vm345, %v328, %v343
    %v347 = vsel %vm345, %v331, %v344
    %vm348 = vcmp.eq.s32.totalorder %v341, 2
    %v349 = vsel %vm348, %v336, %v346
    %v350 = vsel %vm348, %v339, %v347
    %351 = vst [vmem:[#allocation8] sm:$0xff] %v349
    %352 = vst [vmem:[#allocation8 + $0x8] sm:$0xff] %v350
    // Predicated region
    $region46: #{tpu_custom_call.1} parent=1 // pred_check
      _
    $region47: #{tpu_custom_call.1} parent=1 // pred_check_branch
      %354 = sbr.rel (0) target = $region49
    $region48: #{tpu_custom_call.1} parent=1 // pred_region
      %s356 = ssub.s32 256, 256
      %357 = vsyncadd [#allocation4], %s356
      %s358 = sshll.u32 [#allocation8], 4
      %s359 = int_to_ptr.vmem [resolvable:$true] %s358
      %364 = dma.vmem_to_hbm [thread:$0]  %s359, 256, %s8, [#allocation4], 128, 128, 8
    $region49: #{tpu_custom_call.1} parent=1 // pred_fallthru
      _
    // Predicated region
    $region50: #{tpu_custom_call.1} parent=1 // pred_check
      _
    $region51: #{tpu_custom_call.1} parent=1 // pred_check_branch
      %366 = sbr.rel (0) target = $region53
    $region52: #{tpu_custom_call.1} parent=1 // pred_region
      %367 = dma.done [#allocation4], 256
    $region53: #{tpu_custom_call.1} parent=1 // pred_fallthru
      _
    %368 = vsyncpa [#allocation3], 1
    %369 = vsyncpa [#allocation6], 1
    %370 = vsyncpa [#allocation4], 1

</llo_original>
